<compile_context>
chip_gen: v5e
topology: v5e:2x2
jax: 0.10.0
libtpu: 0.0.40
codegen_flags: <defaults>
</compile_context>

<pallas_src>
import jax
import jax.numpy as jnp
from jax.experimental import pallas as pl
from jax.experimental.pallas import tpu as pltpu


def _conv1x1_kernel(w_ref, b_ref, x_ref, o_ref):
    # w_ref: (C_out, C_in) f32 in SMEM (scalar reads)
    # b_ref: (C_out,)      f32 in SMEM (scalar reads)
    # x_ref: (1, C_in,  TILE_HW) VMEM tile, spatial on lanes
    # o_ref: (1, C_out, TILE_HW) VMEM tile, lane-dense stores
    c_out, c_in = w_ref.shape
    # Hoist the input channel rows once (static, tiny channel count).
    xs = [x_ref[0, ci, :].astype(jnp.float32) for ci in range(c_in)]
    for co in range(c_out):
        acc = xs[0] * w_ref[co, 0]
        for ci in range(1, c_in):
            acc = acc + xs[ci] * w_ref[co, ci]
        acc = acc + b_ref[co]
        o_ref[0, co, :] = acc.astype(o_ref.dtype)


def conv1x1_pallas(x_nchw, weight_oihw, bias_o, *, max_tile_hw=4096):
    """1x1 conv, padding=0. x_nchw: (N, C_in, H, W); weight: (C_out, C_in, 1, 1)."""
    n, c_in, h, w = x_nchw.shape
    c_out = weight_oihw.shape[0]
    hw = h * w

    # Free reshapes only — no NCHW<->NHWC transposes.
    x_r = x_nchw.reshape(n, c_in, hw)
    w_mat = weight_oihw.reshape(c_out, c_in).astype(jnp.float32)
    b_vec = bias_o.reshape(c_out).astype(jnp.float32)

    # Lane-dense spatial tile: whole H*W if small, else a multiple of 128 lanes.
    if hw <= max_tile_hw:
        tile_hw = hw
    else:
        tile_hw = (max_tile_hw // 128) * 128

    grid = (n, pl.cdiv(hw, tile_hw))

    itemsize = jnp.dtype(x_nchw.dtype).itemsize
    cost = pl.CostEstimate(
        flops=2 * n * hw * c_in * c_out,
        transcendentals=0,
        bytes_accessed=(n * c_in * hw + n * c_out * hw) * itemsize
        + (c_in * c_out + c_out) * 4,
    )

    out = pl.pallas_call(
        _conv1x1_kernel,
        out_shape=jax.ShapeDtypeStruct((n, c_out, hw), x_nchw.dtype),
        grid=grid,
        in_specs=[
            pl.BlockSpec(memory_space=pltpu.MemorySpace.SMEM),          # 3x3 weight
            pl.BlockSpec(memory_space=pltpu.MemorySpace.SMEM),          # 3 biases
            pl.BlockSpec((1, c_in, tile_hw), lambda i, j: (i, 0, j)),   # pixel tile
        ],
        out_specs=pl.BlockSpec((1, c_out, tile_hw), lambda i, j: (i, 0, j)),
        compiler_params=pltpu.CompilerParams(
            dimension_semantics=("parallel", "parallel"),
        ),
        cost_estimate=cost,
    )(w_mat, b_vec, x_r)

    return out.reshape(n, c_out, h, w)


if __name__ == "__main__":
    key = jax.random.PRNGKey(0)
    k_x, k_w, k_b = jax.random.split(key, 3)

    in_channels, out_channels = 3, 3
    batch, spatial = 2, 16

    # Deterministic "checkpoint-free" parameter init (PyTorch-style uniform fan-in bound).
    fan_in = in_channels * 1 * 1
    bound = 1.0 / (fan_in ** 0.5)
    weight = jax.random.uniform(
        k_w, (out_channels, in_channels, 1, 1), jnp.float32, -bound, bound
    )
    bias = jax.random.uniform(k_b, (out_channels,), jnp.float32, -bound, bound)

    x = jax.random.normal(k_x, (batch, in_channels, spatial, spatial), jnp.float32)

    y = conv1x1_pallas(x, weight, bias)
    y = jax.block_until_ready(y)

    # Reference check against plain JAX einsum (same math as Conv2d 1x1).
    y_ref = jnp.einsum("nchw,oc->nohw", x, weight.reshape(out_channels, in_channels))
    y_ref = y_ref + bias.reshape(1, out_channels, 1, 1)
    assert y.shape == (batch, out_channels, spatial, spatial)
    assert jnp.allclose(y, y_ref, atol=1e-5, rtol=1e-5)

    print("KERNEL_OK")
</pallas_src>

<mosaic_0001>
module attributes {stable_mosaic.version = 11 : i64} {
  func.func @_conv1x1_kernel(%arg0: i32, %arg1: i32, %arg2: memref<3x3xf32, #tpu.memory_space<smem>>, %arg3: memref<3xf32, #tpu.memory_space<smem>>, %arg4: memref<1x3x256xf32, #tpu.memory_space<vmem>>, %arg5: memref<1x3x256xf32, #tpu.memory_space<vmem>>) attributes {dimension_semantics = [#tpu.dimension_semantics<parallel>, #tpu.dimension_semantics<parallel>], iteration_bounds = array<i64: 2, 1>, scalar_prefetch = 0 : i64, scratch_operands = 0 : i64, tpu.core_type = #tpu.core_type<tc>, window_params = [{transform_indices = @transform_0, window_bounds = array<i64: 3, 3>}, {transform_indices = @transform_1, window_bounds = array<i64: 3>}, {transform_indices = @transform_2, window_bounds = array<i64: 1, 3, 256>}, {transform_indices = @transform_3, window_bounds = array<i64: 1, 3, 256>}]} {
    %c0 = arith.constant 0 : index
    %c0_0 = arith.constant 0 : index
    %c0_1 = arith.constant 0 : index
    %0 = vector.load %arg4[%c0, %c0_0, %c0_1] : memref<1x3x256xf32, #tpu.memory_space<vmem>>, vector<1x1x256xf32>
    %1 = vector.shape_cast %0 : vector<1x1x256xf32> to vector<256xf32>
    %c0_2 = arith.constant 0 : index
    %c1 = arith.constant 1 : index
    %c0_3 = arith.constant 0 : index
    %2 = vector.load %arg4[%c0_2, %c1, %c0_3] : memref<1x3x256xf32, #tpu.memory_space<vmem>>, vector<1x1x256xf32>
    %3 = vector.shape_cast %2 : vector<1x1x256xf32> to vector<256xf32>
    %c0_4 = arith.constant 0 : index
    %c2 = arith.constant 2 : index
    %c0_5 = arith.constant 0 : index
    %4 = vector.load %arg4[%c0_4, %c2, %c0_5] : memref<1x3x256xf32, #tpu.memory_space<vmem>>, vector<1x1x256xf32>
    %5 = vector.shape_cast %4 : vector<1x1x256xf32> to vector<256xf32>
    %c0_6 = arith.constant 0 : index
    %c0_7 = arith.constant 0 : index
    %6 = memref.load %arg2[%c0_6, %c0_7] : memref<3x3xf32, #tpu.memory_space<smem>>
    %7 = vector.broadcast %6 : f32 to vector<256xf32>
    %8 = arith.mulf %1, %7 : vector<256xf32>
    %c0_8 = arith.constant 0 : index
    %c1_9 = arith.constant 1 : index
    %9 = memref.load %arg2[%c0_8, %c1_9] : memref<3x3xf32, #tpu.memory_space<smem>>
    %10 = vector.broadcast %9 : f32 to vector<256xf32>
    %11 = arith.mulf %3, %10 : vector<256xf32>
    %12 = arith.addf %8, %11 : vector<256xf32>
    %c0_10 = arith.constant 0 : index
    %c2_11 = arith.constant 2 : index
    %13 = memref.load %arg2[%c0_10, %c2_11] : memref<3x3xf32, #tpu.memory_space<smem>>
    %14 = vector.broadcast %13 : f32 to vector<256xf32>
    %15 = arith.mulf %5, %14 : vector<256xf32>
    %16 = arith.addf %12, %15 : vector<256xf32>
    %c0_12 = arith.constant 0 : index
    %17 = memref.load %arg3[%c0_12] : memref<3xf32, #tpu.memory_space<smem>>
    %18 = vector.broadcast %17 : f32 to vector<256xf32>
    %19 = arith.addf %16, %18 : vector<256xf32>
    %c0_13 = arith.constant 0 : index
    %c0_14 = arith.constant 0 : index
    %c0_15 = arith.constant 0 : index
    %20 = vector.load %arg5[%c0_13, %c0_14, %c0_15] : memref<1x3x256xf32, #tpu.memory_space<vmem>>, vector<1x1x256xf32>
    %21 = vector.shape_cast %20 : vector<1x1x256xf32> to vector<256xf32>
    %22 = vector.shape_cast %19 : vector<256xf32> to vector<1x1x256xf32>
    tpu.vector_store %arg5[%c0_13, %c0_14, %c0_15], %22 {strides = array<i32>} : memref<1x3x256xf32, #tpu.memory_space<vmem>>, vector<1x1x256xf32>,
    %c1_16 = arith.constant 1 : index
    %c0_17 = arith.constant 0 : index
    %23 = memref.load %arg2[%c1_16, %c0_17] : memref<3x3xf32, #tpu.memory_space<smem>>
    %24 = vector.broadcast %23 : f32 to vector<256xf32>
    %25 = arith.mulf %1, %24 : vector<256xf32>
    %c1_18 = arith.constant 1 : index
    %c1_19 = arith.constant 1 : index
    %26 = memref.load %arg2[%c1_18, %c1_19] : memref<3x3xf32, #tpu.memory_space<smem>>
    %27 = vector.broadcast %26 : f32 to vector<256xf32>
    %28 = arith.mulf %3, %27 : vector<256xf32>
    %29 = arith.addf %25, %28 : vector<256xf32>
    %c1_20 = arith.constant 1 : index
    %c2_21 = arith.constant 2 : index
    %30 = memref.load %arg2[%c1_20, %c2_21] : memref<3x3xf32, #tpu.memory_space<smem>>
    %31 = vector.broadcast %30 : f32 to vector<256xf32>
    %32 = arith.mulf %5, %31 : vector<256xf32>
    %33 = arith.addf %29, %32 : vector<256xf32>
    %c1_22 = arith.constant 1 : index
    %34 = memref.load %arg3[%c1_22] : memref<3xf32, #tpu.memory_space<smem>>
    %35 = vector.broadcast %34 : f32 to vector<256xf32>
    %36 = arith.addf %33, %35 : vector<256xf32>
    %c0_23 = arith.constant 0 : index
    %c1_24 = arith.constant 1 : index
    %c0_25 = arith.constant 0 : index
    %37 = vector.load %arg5[%c0_23, %c1_24, %c0_25] : memref<1x3x256xf32, #tpu.memory_space<vmem>>, vector<1x1x256xf32>
    %38 = vector.shape_cast %37 : vector<1x1x256xf32> to vector<256xf32>
    %39 = vector.shape_cast %36 : vector<256xf32> to vector<1x1x256xf32>
    tpu.vector_store %arg5[%c0_23, %c1_24, %c0_25], %39 {strides = array<i32>} : memref<1x3x256xf32, #tpu.memory_space<vmem>>, vector<1x1x256xf32>,
    %c2_26 = arith.constant 2 : index
    %c0_27 = arith.constant 0 : index
    %40 = memref.load %arg2[%c2_26, %c0_27] : memref<3x3xf32, #tpu.memory_space<smem>>
    %41 = vector.broadcast %40 : f32 to vector<256xf32>
    %42 = arith.mulf %1, %41 : vector<256xf32>
    %c2_28 = arith.constant 2 : index
    %c1_29 = arith.constant 1 : index
    %43 = memref.load %arg2[%c2_28, %c1_29] : memref<3x3xf32, #tpu.memory_space<smem>>
    %44 = vector.broadcast %43 : f32 to vector<256xf32>
    %45 = arith.mulf %3, %44 : vector<256xf32>
    %46 = arith.addf %42, %45 : vector<256xf32>
    %c2_30 = arith.constant 2 : index
    %c2_31 = arith.constant 2 : index
    %47 = memref.load %arg2[%c2_30, %c2_31] : memref<3x3xf32, #tpu.memory_space<smem>>
    %48 = vector.broadcast %47 : f32 to vector<256xf32>
    %49 = arith.mulf %5, %48 : vector<256xf32>
    %50 = arith.addf %46, %49 : vector<256xf32>
    %c2_32 = arith.constant 2 : index
    %51 = memref.load %arg3[%c2_32] : memref<3xf32, #tpu.memory_space<smem>>
    %52 = vector.broadcast %51 : f32 to vector<256xf32>
    %53 = arith.addf %50, %52 : vector<256xf32>
    %c0_33 = arith.constant 0 : index
    %c2_34 = arith.constant 2 : index
    %c0_35 = arith.constant 0 : index
    %54 = vector.load %arg5[%c0_33, %c2_34, %c0_35] : memref<1x3x256xf32, #tpu.memory_space<vmem>>, vector<1x1x256xf32>
    %55 = vector.shape_cast %54 : vector<1x1x256xf32> to vector<256xf32>
    %56 = vector.shape_cast %53 : vector<256xf32> to vector<1x1x256xf32>
    tpu.vector_store %arg5[%c0_33, %c2_34, %c0_35], %56 {strides = array<i32>} : memref<1x3x256xf32, #tpu.memory_space<vmem>>, vector<1x1x256xf32>,
    return
  }
  func.func @transform_0(%arg0: i32, %arg1: i32) -> (i32, i32) {
    %c0_i32 = arith.constant 0 : i32
    %c0_i32_0 = arith.constant 0 : i32
    %c0_i32_1 = arith.constant 0 : i32
    return %c0_i32, %c0_i32_0 : i32, i32
  }
  func.func @transform_1(%arg0: i32, %arg1: i32) -> i32 {
    %c0_i32 = arith.constant 0 : i32
    %c0_i32_0 = arith.constant 0 : i32
    return %c0_i32 : i32
  }
  func.func @transform_2(%arg0: i32, %arg1: i32) -> (i32, i32, i32) {
    %c0_i32 = arith.constant 0 : i32
    %c0_i32_0 = arith.constant 0 : i32
    return %arg0, %c0_i32, %arg1 : i32, i32, i32
  }
  func.func @transform_3(%arg0: i32, %arg1: i32) -> (i32, i32, i32) {
    %c0_i32 = arith.constant 0 : i32
    %c0_i32_0 = arith.constant 0 : i32
    return %arg0, %c0_i32, %arg1 : i32, i32, i32
  }
}

</mosaic_0001>

<llo_original>
// kernel: tpu_custom_call.1
$region0: #{tpu_custom_call.1}
  #allocation0 [shape = 'u32[]', space=smem, size = 0x4, offset = 0x4, fixed_abs, tag = 'smem constant byte address 0x4 - core index']
  #allocation1 [shape = 'u32[72,128]{1,0:T(1,128)}', space=vmem, size = 0x9000, scoped, tag = 'internal scratch']
  %s0 = inlined_call_operand.vmem [shape: f32[3,3], index: 0, kind: input, shape index: {}]
  %s1 = inlined_call_operand.vmem [shape: f32[3], index: 1, kind: input, shape index: {}]
  %s2 = inlined_call_operand.vmem [shape: f32[2,3,256], index: 2, kind: input, shape index: {}]
  %s3 = inlined_call_operand.vmem [shape: f32[2,3,256], index: 3, kind: output, shape index: {}]
  %s4 = sld [smem:[#allocation0]]
  $region53: #{tpu_custom_call.1} parent=0
    _
  %s6 = ssub.s32 1, %s4
  %s7 = scalar_select 0, %s6, %s4
  $region1: #{tpu_custom_call.1} parent=0
    #allocation2 [shape = 'u8[2048]{0}', space=smem, size = 0x800, scoped, tag = 'input window, operand 0, single buffered']
    #allocation3 [shape = 's32[2]{0}', space=sflag, size = 0x8, scoped, tag = 'scoped memory for tpu_custom_call.1']
    #allocation4 [shape = 'u8[512]{0}', space=smem, size = 0x200, scoped, tag = 'input window, operand 1, single buffered']
    #allocation5 [shape = 's32[1]{0}', space=sflag, size = 0x4, scoped, tag = 'scoped memory for tpu_custom_call.1']
    %8 = vsyncpa [#allocation3], 0
    %9 = vsyncpa [#allocation5], 0
    loop: start=0, step=1, limit=4
    $region2: #{tpu_custom_call.1} parent=1 // loop_pre_header
      _
    $region3: #{tpu_custom_call.1} parent=1 // loop_header
      %s11 = sphi 0, %s15
      %p12 = scmp.ge.s32.totalorder %s11, 4
      %s18 = sphi 0, %s30
      %s19 = sphi 0, %s26
      %s20 = sphi 0, %s18
      %s21 = sphi 0, %s19
      %s22 = sphi 0, %s20
      %s23 = sphi 0, %s21
      %s31 = sphi 0, %s31
      %s33 = sphi 0, %s31
      %s34 = sphi 0, %s33
      %s48 = sphi 0, %s34
      %s52 = sphi 0, %s52
      %s54 = sphi 0, %s52
      %s55 = sphi 0, %s54
      %s69 = sphi 0, %s55
      %s77 = sphi 0, %s79
      %s80 = sphi 0, %s77
      %s81 = sphi 0, %s80
      %s97 = sphi 0, %s81
      %s105 = sphi 0, %s107
      %s108 = sphi 0, %s105
      %s109 = sphi 0, %s108
      %s125 = sphi 0, %s109
    $region4: #{tpu_custom_call.1} parent=1 // loop_header_branch
      %14 = sbr.rel (%p12) target = $region8
    $region5: #{tpu_custom_call.1} parent=1 // loop_body
      %s16 = ssub.s32 %s11, 1
      %s17 = ssub.s32 %s11, 2
      %s24 = sadd.s32 1, %s19
      %p25 = scmp.ge.s32.totalorder %s24, 1
      %s26 = scalar_select %p25, 0, %s24
      %s27 = sadd.s32 1, %s18
      %s28 = scalar_select %p25, %s27, %s18
      %p29 = scmp.ge.s32.totalorder %s28, 2
      %s30 = scalar_select %p29, 0, %s28
      %s32 = sadd.s32 %s31, 1
      %p35 = scmp.eq.s32.totalorder %s11, 1
      %p36 = scmp.ne.s32.totalorder %s31, %s33
      %p37 = scmp.eq.s32.totalorder %s11, 0
      %p38 = por %p36, %p37
      %p39 = scmp.ne.s32.totalorder %s31, %s33
      %p40 = scmp.eq.s32.totalorder %s16, 1
      %p41 = por %p39, %p40
      %p42 = scmp.ne.s32.totalorder %s33, %s34
      %p43 = scmp.eq.s32.totalorder %s16, 0
      %p44 = por %p42, %p43
      %p45 = scmp.ne.s32.totalorder %s33, %s34
      %p46 = scmp.eq.s32.totalorder %s17, 1
      %p47 = por %p45, %p46
      %p49 = scmp.ne.s32.totalorder %s34, %s48
      %p50 = scmp.eq.s32.totalorder %s17, 0
      %p51 = por %p49, %p50
      %s53 = sadd.s32 %s52, 1
      %p56 = scmp.eq.s32.totalorder %s11, 1
      %p57 = scmp.ne.s32.totalorder %s52, %s54
      %p58 = scmp.eq.s32.totalorder %s11, 0
      %p59 = por %p57, %p58
      %p60 = scmp.ne.s32.totalorder %s52, %s54
      %p61 = scmp.eq.s32.totalorder %s16, 1
      %p62 = por %p60, %p61
      %p63 = scmp.ne.s32.totalorder %s54, %s55
      %p64 = scmp.eq.s32.totalorder %s16, 0
      %p65 = por %p63, %p64
      %p66 = scmp.ne.s32.totalorder %s54, %s55
      %p67 = scmp.eq.s32.totalorder %s17, 1
      %p68 = por %p66, %p67
      %p70 = scmp.ne.s32.totalorder %s55, %s69
      %p71 = scmp.eq.s32.totalorder %s17, 0
      %p72 = por %p70, %p71
      %s73 = ssub.s32 %s18, %s30
      %s74 = ssub.s32 %s19, %s26
      %s75 = sor.u32 %s73, %s74
      %p76 = scmp.eq.s32.totalorder %s75, 0
      %s78 = sadd.s32 %s77, 1
      %s79 = scalar_select %p76, %s77, %s78
      %p82 = pneg %p76
      %p83 = scmp.eq.s32.totalorder %s11, 1
      %p84 = por %p82, %p83
      %p85 = scmp.ne.s32.totalorder %s77, %s80
      %p86 = scmp.eq.s32.totalorder %s11, 0
      %p87 = por %p85, %p86
      %p88 = scmp.ne.s32.totalorder %s77, %s80
      %p89 = scmp.eq.s32.totalorder %s16, 1
      %p90 = por %p88, %p89
      %p91 = scmp.ne.s32.totalorder %s80, %s81
      %p92 = scmp.eq.s32.totalorder %s16, 0
      %p93 = por %p91, %p92
      %p94 = scmp.ne.s32.totalorder %s80, %s81
      %p95 = scmp.eq.s32.totalorder %s17, 1
      %p96 = por %p94, %p95
      %p98 = scmp.ne.s32.totalorder %s81, %s97
      %p99 = scmp.eq.s32.totalorder %s17, 0
      %p100 = por %p98, %p99
      %s101 = ssub.s32 %s18, %s30
      %s102 = ssub.s32 %s19, %s26
      %s103 = sor.u32 %s101, %s102
      %p104 = scmp.eq.s32.totalorder %s103, 0
      %s106 = sadd.s32 %s105, 1
      %s107 = scalar_select %p104, %s105, %s106
      %p110 = pneg %p104
      %p111 = scmp.eq.s32.totalorder %s11, 1
      %p112 = por %p110, %p111
      %p113 = scmp.ne.s32.totalorder %s105, %s108
      %p114 = scmp.eq.s32.totalorder %s11, 0
      %p115 = por %p113, %p114
      %p116 = scmp.ne.s32.totalorder %s105, %s108
      %p117 = scmp.eq.s32.totalorder %s16, 1
      %p118 = por %p116, %p117
      %p119 = scmp.ne.s32.totalorder %s108, %s109
      %p120 = scmp.eq.s32.totalorder %s16, 0
      %p121 = por %p119, %p120
      %p122 = scmp.ne.s32.totalorder %s108, %s109
      %p123 = scmp.eq.s32.totalorder %s17, 1
      %p124 = por %p122, %p123
      %p126 = scmp.ne.s32.totalorder %s109, %s125
      %p127 = scmp.eq.s32.totalorder %s17, 0
      %p128 = por %p126, %p127
      %p129 = scmp.le.s32.totalorder 1, %s11
      %p130 = scmp.lt.s32.totalorder %s11, 3
      %p131 = pnand %p129, %p130
      %p132 = pneg %p131
      // Predicated region
      $region9: #{tpu_custom_call.1} parent=5 // pred_check
        _
      $region10: #{tpu_custom_call.1} parent=5 // pred_check_branch
        %134 = sbr.rel (%p131) target = $region12
      $region11: #{tpu_custom_call.1} parent=5 // pred_region
        %s135 = ssub.s32 %s11, 1
        // Predicated region
        $region13: #{tpu_custom_call.1} parent=11 // pred_check
          %p136 = pneg %p44
        $region14: #{tpu_custom_call.1} parent=11 // pred_check_branch
          %138 = sbr.rel (%p136) target = $region16
        $region15: #{tpu_custom_call.1} parent=11 // pred_region
          %140 = vsyncadd [#allocation3], 0
          %s142 = sshll.u32 %s0, 4
          %s143 = int_to_ptr.vmem [resolvable:$true] %s142
          %145 = dma.vmem_to_smem %s143, 64, [#allocation2], [#allocation3]
        $region16: #{tpu_custom_call.1} parent=11 // pred_fallthru
          _
        // Predicated region
        $region17: #{tpu_custom_call.1} parent=11 // pred_check
          %p146 = pneg %p65
        $region18: #{tpu_custom_call.1} parent=11 // pred_check_branch
          %148 = sbr.rel (%p146) target = $region20
        $region19: #{tpu_custom_call.1} parent=11 // pred_region
          %150 = vsyncadd [#allocation5], 0
          %s152 = sshll.u32 %s1, 4
          %s153 = int_to_ptr.vmem [resolvable:$true] %s152
          %155 = dma.vmem_to_smem %s153, 16, [#allocation4], [#allocation5]
        $region20: #{tpu_custom_call.1} parent=11 // pred_fallthru
          _
      $region12: #{tpu_custom_call.1} parent=5 // pred_fallthru
        _
      %p156 = scmp.lt.s32.totalorder %s11, 2
      // Predicated region
      $region21: #{tpu_custom_call.1} parent=5 // pred_check
        %p157 = pneg %p156
      $region22: #{tpu_custom_call.1} parent=5 // pred_check_branch
        %159 = sbr.rel (%p157) target = $region24
      $region23: #{tpu_custom_call.1} parent=5 // pred_region
        // Predicated region
        $region25: #{tpu_custom_call.1} parent=23 // pred_check
          %p160 = pneg %p87
        $region26: #{tpu_custom_call.1} parent=23 // pred_check_branch
          %162 = sbr.rel (%p160) target = $region28
        $region27: #{tpu_custom_call.1} parent=23 // pred_region
          %s163 = smul.u32 2, %s19
          %p164 = scmp.lt.s32.totalorder %s18, 1
          %s165 = scalar_select %p164, %s18, 1
          %p166 = scmp.lt.s32.totalorder %s163, 1
          %s167 = scalar_select %p166, %s163, 1
          %s168 = smul.addr %s165, 2
          %s169 = sadd.s32 %s167, %s168
          %s170 = smul.addr %s169, 4
          %s171 = scalar_lea.vmem %s2, %s170
          %s172 = smul.u32 2, %s19
        $region28: #{tpu_custom_call.1} parent=23 // pred_fallthru
          _
      $region24: #{tpu_custom_call.1} parent=5 // pred_fallthru
        _
      %p173 = scmp.le.s32.totalorder 1, %s11
      %p174 = scmp.lt.s32.totalorder %s11, 3
      %p175 = pnand %p173, %p174
      %p176 = pneg %p175
      // Predicated region
      $region29: #{tpu_custom_call.1} parent=5 // pred_check
        _
      $region30: #{tpu_custom_call.1} parent=5 // pred_check_branch
        %178 = sbr.rel (%p175) target = $region32
      $region31: #{tpu_custom_call.1} parent=5 // pred_region
        %s179 = ssub.s32 %s11, 1
        // Predicated region
        $region33: #{tpu_custom_call.1} parent=31 // pred_check
          %p180 = pneg %p44
        $region34: #{tpu_custom_call.1} parent=31 // pred_check_branch
          %182 = sbr.rel (%p180) target = $region36
        $region35: #{tpu_custom_call.1} parent=31 // pred_region
          %184 = dma.done [#allocation3], 64
        $region36: #{tpu_custom_call.1} parent=31 // pred_fallthru
          _
        // Predicated region
        $region37: #{tpu_custom_call.1} parent=31 // pred_check
          %p185 = pneg %p65
        $region38: #{tpu_custom_call.1} parent=31 // pred_check_branch
          %187 = sbr.rel (%p185) target = $region40
        $region39: #{tpu_custom_call.1} parent=31 // pred_region
          %189 = dma.done [#allocation5], 16
        $region40: #{tpu_custom_call.1} parent=31 // pred_fallthru
          _
        %190 = sfence
        %p191 = pneg %p44
        %p192 = pneg %p41
        %p193 = pneg %p65
        %p194 = pneg %p62
        %s195 = smul.u32 2, %s21
        %p196 = scmp.lt.s32.totalorder %s20, 1
        %s197 = scalar_select %p196, %s20, 1
        %p198 = scmp.lt.s32.totalorder %s195, 1
        %s199 = scalar_select %p198, %s195, 1
        %s200 = smul.addr %s197, 2
        %s201 = sadd.s32 %s199, %s200
        %s202 = smul.addr %s201, 4
        %s203 = scalar_lea.vmem %s2, %s202
        %p204 = pneg %p93
        %p205 = pneg %p90
        %p206 = pneg %p121
        %p207 = pneg %p118
        %s208 = smul.u32 2, %s21
        %p209 = scmp.lt.s32.totalorder %s20, 1
        %s210 = scalar_select %p209, %s20, 1
        %p211 = scmp.lt.s32.totalorder %s208, 1
        %s212 = scalar_select %p211, %s208, 1
        %s213 = smul.addr %s210, 2
        %s214 = sadd.s32 %s212, %s213
        %s215 = smul.addr %s214, 4
        %s216 = scalar_lea.vmem %s3, %s215
        %s217 = smul.u32 2, %s21
        %p218 = scmp.lt.s32.totalorder %s20, 1
        %s219 = scalar_select %p218, %s20, 1
        %p220 = scmp.lt.s32.totalorder %s217, 1
        %s221 = scalar_select %p220, %s217, 1
        %s222 = smul.addr %s219, 2
        %s223 = sadd.s32 %s221, %s222
        %s224 = smul.addr %s223, 4
        %s225 = scalar_lea.vmem %s2, %s224
        %s226 = smul.u32 2, %s21
        %s227 = smul.u32 2, %s21
        %p228 = scmp.lt.s32.totalorder %s20, 1
        %s229 = scalar_select %p228, %s20, 1
        %p230 = scmp.lt.s32.totalorder %s227, 1
        %s231 = scalar_select %p230, %s227, 1
        %s232 = smul.addr %s229, 2
        %s233 = sadd.s32 %s231, %s232
        %s234 = smul.addr %s233, 4
        %s235 = scalar_lea.vmem %s3, %s234
        %s236 = smul.u32 2, %s21
        %v237 = vld [vmem:[%s225] ss:$4 sm:$0x3]
        %s238 = scalar_lea.vmem %s225, 1
        %v239 = vld [vmem:[%s238] ss:$4 sm:$0x3]
        %s240 = scalar_lea.vmem %s225, 2
        %v241 = vld [vmem:[%s240] ss:$4 sm:$0x3]
        %s242 = sld [smem:[#allocation2]]
        %v243 = vstv %s242
        %v244 = vmul.f32 %v237, %v243
        %s245 = sld [smem:[#allocation2 + $0x1]]
        %v246 = vstv %s245
        %v247 = vmul.f32 %v239, %v246
        %v248 = vadd.f32 %v244, %v247
        %s249 = sld [smem:[#allocation2 + $0x2]]
        %v250 = vstv %s249
        %v251 = vmul.f32 %v241, %v250
        %v252 = vadd.f32 %v248, %v251
        %s253 = sld [smem:[#allocation4]]
        %v254 = vstv %s253
        %v255 = vadd.f32 %v252, %v254
        %v256 = vlaneseq
        %vm257 = vcmp.ge.s32.totalorder %v256, 0
        %vm258 = vcmp.lt.s32.totalorder %v256, 256
        %vm259 = vmand %vm257, %vm258
        %260 = vst.msk [vmem:[%s235] ss:$4 sm:$0x3] %vm259, %v255
        %s261 = sld [smem:[#allocation2 + $0x80]]
        %v262 = vstv %s261
        %v263 = vmul.f32 %v237, %v262
        %s264 = sld [smem:[#allocation2 + $0x81]]
        %v265 = vstv %s264
        %v266 = vmul.f32 %v239, %v265
        %v267 = vadd.f32 %v263, %v266
        %s268 = sld [smem:[#allocation2 + $0x82]]
        %v269 = vstv %s268
        %v270 = vmul.f32 %v241, %v269
        %v271 = vadd.f32 %v267, %v270
        %s272 = sld [smem:[#allocation4 + $0x1]]
        %v273 = vstv %s272
        %v274 = vadd.f32 %v271, %v273
        %s275 = scalar_lea.vmem %s235, 1
        %276 = vst.msk [vmem:[%s275] ss:$4 sm:$0x3] %vm259, %v274
        %s277 = sld [smem:[#allocation2 + $0x100]]
        %v278 = vstv %s277
        %v279 = vmul.f32 %v237, %v278
        %s280 = sld [smem:[#allocation2 + $0x101]]
        %v281 = vstv %s280
        %v282 = vmul.f32 %v239, %v281
        %v283 = vadd.f32 %v279, %v282
        %s284 = sld [smem:[#allocation2 + $0x102]]
        %v285 = vstv %s284
        %v286 = vmul.f32 %v241, %v285
        %v287 = vadd.f32 %v283, %v286
        %s288 = sld [smem:[#allocation4 + $0x2]]
        %v289 = vstv %s288
        %v290 = vadd.f32 %v287, %v289
        %s291 = scalar_lea.vmem %s235, 2
        %292 = vst.msk [vmem:[%s291] ss:$4 sm:$0x3] %vm259, %v290
        %s293 = smul.u32 2, %s21
        %p294 = scmp.lt.s32.totalorder %s20, 1
        %s295 = scalar_select %p294, %s20, 1
        %p296 = scmp.lt.s32.totalorder %s293, 1
        %s297 = scalar_select %p296, %s293, 1
        %s298 = smul.addr %s295, 2
        %s299 = sadd.s32 %s297, %s298
        %s300 = smul.addr %s299, 4
        %s301 = scalar_lea.vmem %s3, %s300
        // Predicated region
        $region41: #{tpu_custom_call.1} parent=31 // pred_check
          %p302 = pneg %p118
        $region42: #{tpu_custom_call.1} parent=31 // pred_check_branch
          %304 = sbr.rel (%p302) target = $region44
        $region43: #{tpu_custom_call.1} parent=31 // pred_region
          %s305 = smul.u32 2, %s21
        $region44: #{tpu_custom_call.1} parent=31 // pred_fallthru
          _
      $region32: #{tpu_custom_call.1} parent=5 // pred_fallthru
        _
      %p306 = scmp.le.s32.totalorder 2, %s11
      // Predicated region
      $region45: #{tpu_custom_call.1} parent=5 // pred_check
        %p307 = pneg %p306
      $region46: #{tpu_custom_call.1} parent=5 // pred_check_branch
        %309 = sbr.rel (%p307) target = $region48
      $region47: #{tpu_custom_call.1} parent=5 // pred_region
        %s310 = ssub.s32 %s11, 2
        // Predicated region
        $region49: #{tpu_custom_call.1} parent=47 // pred_check
          %p311 = pneg %p124
        $region50: #{tpu_custom_call.1} parent=47 // pred_check_branch
          %313 = sbr.rel (%p311) target = $region52
        $region51: #{tpu_custom_call.1} parent=47 // pred_region
          %s314 = smul.u32 2, %s23
          %p315 = scmp.lt.s32.totalorder %s22, 1
          %s316 = scalar_select %p315, %s22, 1
          %p317 = scmp.lt.s32.totalorder %s314, 1
          %s318 = scalar_select %p317, %s314, 1
          %s319 = smul.addr %s316, 2
          %s320 = sadd.s32 %s318, %s319
          %s321 = smul.addr %s320, 4
          %s322 = scalar_lea.vmem %s3, %s321
        $region52: #{tpu_custom_call.1} parent=47 // pred_fallthru
          _
      $region48: #{tpu_custom_call.1} parent=5 // pred_fallthru
        _
    $region6: #{tpu_custom_call.1} parent=1 // loop_footer
      %s15 = sadd.s32 1, %s11
    $region7: #{tpu_custom_call.1} parent=1 // loop_footer_branch
      %10 = sbr.rel target = $region3
    $region8: #{tpu_custom_call.1} parent=1 // loop_exit
      _
    %323 = vsyncpa [#allocation3], 1
    %s324 = scalar_lea.sflag [#allocation3], 1
    %325 = vsyncpa %s324, 1
    %326 = vsyncpa [#allocation5], 1

</llo_original>
